<compile_context>
chip_gen: v5e
topology: v5e:2x2
jax: 0.10.0
libtpu: 0.0.40
codegen_flags: <defaults>
</compile_context>

<pallas_src>
import functools

import jax
import jax.numpy as jnp
from jax.experimental import pallas as pl
from jax.experimental.pallas import tpu as pltpu


# ----------------------------- tiling helpers -----------------------------

def _round_up(x, m):
    return ((x + m - 1) // m) * m


def _pick_row_tile(n, target=1024):
    """Node-row tile: multiple of 32 (int8 sublane packing), capped at `target`.

    When several grid steps are needed, prefer an even step count so the two
    TensorCores of a v7x chip stay balanced under "parallel" semantics.
    """
    if n <= target:
        return max(32, _round_up(n, 32))
    for tm in (target, target // 2, target // 4):
        if pl.cdiv(n, tm) % 2 == 0:
            return tm
    return target


def _adj_spec(tm, n, steps):
    """BlockSpec for the int8 adjacency row-tile stream (the dominant DMA)."""
    if steps >= 3:
        # Extra buffer hides DMA latency/jitter at pipeline start/end.
        return pl.BlockSpec((tm, n), lambda i: (i, 0), pipeline_mode=pl.Buffered(3))
    return pl.BlockSpec((tm, n), lambda i: (i, 0))


# ------------------------------- kernels ----------------------------------

def _linear1_kernel(x_ref, w_ref, b_ref, d_ref, o_ref):
    """o = deg^-1/2 * (x @ W1 + b1); x cast f32 -> bf16 per tile, in VMEM."""
    x_bf = x_ref[...].astype(jnp.bfloat16)
    h = jnp.dot(x_bf, w_ref[...], preferred_element_type=jnp.float32)
    h = (h + b_ref[...]) * d_ref[...]
    o_ref[...] = h.astype(o_ref.dtype)


def _aggr1_linear2_kernel(a_ref, h_ref, d_ref, w2_ref, b2_ref, o_ref):
    """o = deg^-1/2 * (relu(deg^-1/2 * (A_tile @ h1s)) @ W2 + b2).

    Fuses: aggregation of layer 1, ReLU, the second linear layer, and the
    pre-scaling for the second aggregation. a1 / h2 never touch HBM.
    """
    a_bf = a_ref[...].astype(jnp.float32).astype(jnp.bfloat16)  # int8 counts -> bf16 (exact)
    t = jnp.dot(a_bf, h_ref[...], preferred_element_type=jnp.float32)
    a1 = jnp.maximum(t * d_ref[...], 0.0)                       # relu(S @ h1) tile, f32
    h2 = jnp.dot(a1.astype(jnp.bfloat16), w2_ref[...],
                 preferred_element_type=jnp.float32)
    h2 = (h2 + b2_ref[...]) * d_ref[...]
    o_ref[...] = h2.astype(o_ref.dtype)


def _aggr2_logsoftmax_kernel(a_ref, h_ref, d_ref, o_ref):
    """o = log_softmax(deg^-1/2 * (A_tile @ h2s), axis=1)."""
    a_bf = a_ref[...].astype(jnp.float32).astype(jnp.bfloat16)
    logits = jnp.dot(a_bf, h_ref[...], preferred_element_type=jnp.float32) * d_ref[...]
    m = jnp.max(logits, axis=1, keepdims=True)
    z = logits - m
    o_ref[...] = (z - jnp.log(jnp.sum(jnp.exp(z), axis=1, keepdims=True))).astype(o_ref.dtype)


# --------------------------- pallas_call wrappers --------------------------

def linear1_pallas(x, w1, b1, d_isqrt, *, row_tile=None, out_dtype=jnp.bfloat16):
    n, fin = x.shape
    fout = w1.shape[1]
    tm = row_tile or _pick_row_tile(n)
    steps = pl.cdiv(n, tm)
    ce = pl.CostEstimate(
        flops=2 * n * fin * fout,
        transcendentals=0,
        bytes_accessed=n * fin * 4 + fin * fout * 2 + fout * 4 + n * 4 + n * fout * 2)
    return pl.pallas_call(
        _linear1_kernel,
        out_shape=jax.ShapeDtypeStruct((n, fout), out_dtype),
        grid=(steps,),
        in_specs=[
            pl.BlockSpec((tm, fin), lambda i: (i, 0)),     # x row tile (f32, cast in-kernel)
            pl.BlockSpec((fin, fout), lambda i: (0, 0)),   # W1 (resident)
            pl.BlockSpec((1, fout), lambda i: (0, 0)),     # b1 (resident)
            pl.BlockSpec((tm, 1), lambda i: (i, 0)),       # deg^-1/2 row tile
        ],
        out_specs=pl.BlockSpec((tm, fout), lambda i: (i, 0)),
        compiler_params=pltpu.CompilerParams(dimension_semantics=("parallel",)),
        cost_estimate=ce,
    )(x, w1, b1, d_isqrt)


def aggr1_linear2_pallas(a_int8, h1s, d_isqrt, w2, b2, *, row_tile=None,
                         out_dtype=jnp.bfloat16):
    n = a_int8.shape[0]
    k = h1s.shape[1]
    fout = w2.shape[1]
    tm = row_tile or _pick_row_tile(n)
    steps = pl.cdiv(n, tm)
    ce = pl.CostEstimate(
        flops=2 * n * n * k + 2 * n * k * fout,
        transcendentals=0,
        bytes_accessed=n * n * 1 + n * k * 2 + k * fout * 2 + n * 4 + n * fout * 2)
    return pl.pallas_call(
        _aggr1_linear2_kernel,
        out_shape=jax.ShapeDtypeStruct((n, fout), out_dtype),
        grid=(steps,),
        in_specs=[
            _adj_spec(tm, n, steps),                       # A row tile (int8)
            pl.BlockSpec((n, k), lambda i: (0, 0)),        # full h1s (resident)
            pl.BlockSpec((tm, 1), lambda i: (i, 0)),       # deg^-1/2 row tile
            pl.BlockSpec((k, fout), lambda i: (0, 0)),     # W2 (resident)
            pl.BlockSpec((1, fout), lambda i: (0, 0)),     # b2 (resident)
        ],
        out_specs=pl.BlockSpec((tm, fout), lambda i: (i, 0)),
        compiler_params=pltpu.CompilerParams(dimension_semantics=("parallel",)),
        cost_estimate=ce,
    )(a_int8, h1s, d_isqrt, w2, b2)


def aggr2_logsoftmax_pallas(a_int8, h2s, d_isqrt, *, row_tile=None,
                            out_dtype=jnp.float32):
    n = a_int8.shape[0]
    fout = h2s.shape[1]
    tm = row_tile or _pick_row_tile(n)
    steps = pl.cdiv(n, tm)
    ce = pl.CostEstimate(
        flops=2 * n * n * fout,
        transcendentals=n * fout,
        bytes_accessed=n * n * 1 + n * fout * 2 + n * 4 + n * fout * 4)
    return pl.pallas_call(
        _aggr2_logsoftmax_kernel,
        out_shape=jax.ShapeDtypeStruct((n, fout), out_dtype),
        grid=(steps,),
        in_specs=[
            _adj_spec(tm, n, steps),                       # A row tile (int8)
            pl.BlockSpec((n, fout), lambda i: (0, 0)),     # full h2s (resident)
            pl.BlockSpec((tm, 1), lambda i: (i, 0)),       # deg^-1/2 row tile
        ],
        out_specs=pl.BlockSpec((tm, fout), lambda i: (i, 0)),
        compiler_params=pltpu.CompilerParams(dimension_semantics=("parallel",)),
        cost_estimate=ce,
    )(a_int8, h2s, d_isqrt)


# ---------------- plain-JAX glue (index arithmetic from GCNConv) ----------------

def add_self_connect(edge_index, num_nodes):
    # GCNConv.addSelfConnect
    self_conn = jnp.stack(
        [jnp.arange(num_nodes, dtype=edge_index.dtype)] * 2, axis=0)
    return jnp.concatenate([edge_index, self_conn], axis=1)


def build_graph_tensors(edge_index, num_nodes):
    """GCNConv.calDegree + norm + AggrSum mask, factored for the kernels.

    Returns:
      a_int8 : [N, N] edge-count adjacency (duplicate edges sum, exactly as the
               reference's scatter-add of norms does). Counts assumed <= 127.
      d_isqrt: [N, 1] f32 deg^-0.5 (guarded for isolated nodes).
    Built ONCE for a static graph (O(N^2) scatter kept out of the per-forward path).
    """
    row, col = edge_index[0], edge_index[1]
    deg = jnp.zeros((num_nodes,), jnp.float32).at[row].add(1.0)
    d_isqrt = jnp.where(deg > 0, deg ** -0.5, 0.0)
    a = jnp.zeros((num_nodes, num_nodes), jnp.int32).at[row, col].add(1)
    return a.astype(jnp.int8), d_isqrt.reshape(num_nodes, 1)


def net_forward(params, x, a_int8, d_isqrt, *, row_tile=None):
    """Forward pass of Net (eval mode); S @ h == diag(d) @ A @ diag(d) @ h exactly."""
    w1 = params["w1"].astype(jnp.bfloat16)
    w2 = params["w2"].astype(jnp.bfloat16)
    b1 = params["b1"].astype(jnp.float32).reshape(1, -1)
    b2 = params["b2"].astype(jnp.float32).reshape(1, -1)

    # conv1 linear, fused with the deg^-1/2 pre-scaling of its aggregation.
    h1s = linear1_pallas(x, w1, b1, d_isqrt, row_tile=row_tile)

    # conv1 aggregation + ReLU + conv2 linear + pre-scaling of aggregation 2, fused.
    # TODO(synk): F.dropout(x, training=self.training) — eval-mode (identity) implemented.
    h2s = aggr1_linear2_pallas(a_int8, h1s, d_isqrt, w2, b2, row_tile=row_tile)

    # conv2 aggregation + log_softmax over classes.
    return aggr2_logsoftmax_pallas(a_int8, h2s, d_isqrt, row_tile=row_tile)


# ------------------------------------ demo ------------------------------------

def _reference_forward_f32(params, x, edge_index):
    """Pure-JAX f32 reference mirroring the PyTorch module."""
    n = x.shape[0]
    ei = add_self_connect(edge_index, n)
    row, col = ei[0], ei[1]
    deg = jnp.zeros((n,), jnp.float32).at[row].add(1.0)
    dis = deg ** -0.5
    norm = dis[row] * dis[col]
    s = jnp.zeros((n, n), jnp.float32).at[row, col].add(norm)

    h1 = x @ params["w1"] + params["b1"]
    a1 = jnp.maximum(s @ h1, 0.0)
    h2 = a1 @ params["w2"] + params["b2"]
    return jax.nn.log_softmax(s @ h2, axis=1)


def _run_case(key, n, f_in, hid, ncls, e, row_tile=None):
    k1, k2, k3, k4, k5, k6 = jax.random.split(key, 6)
    x = jax.random.normal(k1, (n, f_in), dtype=jnp.float32)
    edge_index = jax.random.randint(k2, (2, e), 0, n, dtype=jnp.int32)

    # w* stored as [in, out] (transpose of torch Linear.weight).
    params = {
        "w1": jax.random.normal(k3, (f_in, hid), dtype=jnp.float32) * 0.1,
        "b1": jax.random.normal(k4, (hid,), dtype=jnp.float32) * 0.1,
        "w2": jax.random.normal(k5, (hid, ncls), dtype=jnp.float32) * 0.1,
        "b2": jax.random.normal(k6, (ncls,), dtype=jnp.float32) * 0.1,
    }

    # Static graph: build the factored adjacency once, outside the jitted forward.
    ei = add_self_connect(edge_index, n)
    a_int8, d_isqrt = build_graph_tensors(ei, n)

    fwd = jax.jit(functools.partial(net_forward, row_tile=row_tile))
    out = fwd(params, x, a_int8, d_isqrt)
    jax.block_until_ready(out)
    assert out.shape == (n, ncls)

    ref = _reference_forward_f32(params, x, edge_index)
    err = float(jnp.max(jnp.abs(out - ref)))
    assert jnp.allclose(out, ref, atol=5e-2, rtol=5e-2), err
    return err


if __name__ == "__main__":
    key = jax.random.PRNGKey(0)
    k_a, k_b = jax.random.split(key)

    # Tiny config (single row tile per kernel).
    _run_case(k_a, n=32, f_in=8, hid=16, ncls=4, e=64)

    # Medium config forcing a multi-step pipelined grid (4 row tiles:
    # exercises the software pipeline and the Buffered(3) adjacency stream).
    _run_case(k_b, n=128, f_in=8, hid=16, ncls=4, e=256, row_tile=32)

    print("KERNEL_OK")
</pallas_src>

<mosaic_0001>
module attributes {stable_mosaic.version = 11 : i64} {
  func.func @_linear1_kernel(%arg0: i32, %arg1: memref<32x8xf32, #tpu.memory_space<vmem>>, %arg2: memref<8x16xbf16, #tpu.memory_space<vmem>>, %arg3: memref<1x16xf32, #tpu.memory_space<vmem>>, %arg4: memref<32x1xf32, #tpu.memory_space<vmem>>, %arg5: memref<32x16xbf16, #tpu.memory_space<vmem>>) attributes {dimension_semantics = [#tpu.dimension_semantics<parallel>], iteration_bounds = array<i64: 1>, scalar_prefetch = 0 : i64, scratch_operands = 0 : i64, tpu.core_type = #tpu.core_type<tc>, window_params = [{transform_indices = @transform_0, window_bounds = array<i64: 32, 8>}, {pipeline_mode = #tpu.pipeline_mode<synchronous>, transform_indices = @transform_1, window_bounds = array<i64: 8, 16>}, {pipeline_mode = #tpu.pipeline_mode<synchronous>, transform_indices = @transform_2, window_bounds = array<i64: 1, 16>}, {transform_indices = @transform_3, window_bounds = array<i64: 32, 1>}, {transform_indices = @transform_4, window_bounds = array<i64: 32, 16>}]} {
    %c0 = arith.constant 0 : index
    %c0_0 = arith.constant 0 : index
    %0 = vector.load %arg1[%c0, %c0_0] : memref<32x8xf32, #tpu.memory_space<vmem>>, vector<32x8xf32>
    %1 = arith.truncf %0 : vector<32x8xf32> to vector<32x8xbf16>
    %c0_1 = arith.constant 0 : index
    %c0_2 = arith.constant 0 : index
    %2 = vector.load %arg2[%c0_1, %c0_2] : memref<8x16xbf16, #tpu.memory_space<vmem>>, vector<8x16xbf16>
    %cst = arith.constant dense<0.000000e+00> : vector<32x16xf32>
    %3 = tpu.matmul %1, %2, %cst {dimension_numbers = #tpu.dot_dimension_numbers<[1], [0], [0], [1], [0, 0, 1, 1], [], []>} : vector<32x8xbf16>, vector<8x16xbf16>, vector<32x16xf32> -> vector<32x16xf32>
    %c0_3 = arith.constant 0 : index
    %c0_4 = arith.constant 0 : index
    %4 = vector.load %arg3[%c0_3, %c0_4] : memref<1x16xf32, #tpu.memory_space<vmem>>, vector<1x16xf32>
    %5 = vector.broadcast %4 : vector<1x16xf32> to vector<32x16xf32>
    %6 = arith.addf %3, %5 : vector<32x16xf32>
    %c0_5 = arith.constant 0 : index
    %c0_6 = arith.constant 0 : index
    %7 = vector.load %arg4[%c0_5, %c0_6] : memref<32x1xf32, #tpu.memory_space<vmem>>, vector<32x1xf32>
    %8 = vector.broadcast %7 : vector<32x1xf32> to vector<32x16xf32>
    %9 = arith.mulf %6, %8 : vector<32x16xf32>
    %10 = arith.truncf %9 : vector<32x16xf32> to vector<32x16xbf16>
    %c0_7 = arith.constant 0 : index
    %c0_8 = arith.constant 0 : index
    %11 = vector.load %arg5[%c0_7, %c0_8] : memref<32x16xbf16, #tpu.memory_space<vmem>>, vector<32x16xbf16>
    tpu.vector_store %arg5[%c0_7, %c0_8], %10 {strides = array<i32>} : memref<32x16xbf16, #tpu.memory_space<vmem>>, vector<32x16xbf16>,
    return
  }
  func.func @transform_0(%arg0: i32) -> (i32, i32) {
    %c0_i32 = arith.constant 0 : i32
    %c0_i32_0 = arith.constant 0 : i32
    return %arg0, %c0_i32 : i32, i32
  }
  func.func @transform_1(%arg0: i32) -> (i32, i32) {
    %c0_i32 = arith.constant 0 : i32
    %c0_i32_0 = arith.constant 0 : i32
    %c0_i32_1 = arith.constant 0 : i32
    return %c0_i32, %c0_i32_0 : i32, i32
  }
  func.func @transform_2(%arg0: i32) -> (i32, i32) {
    %c0_i32 = arith.constant 0 : i32
    %c0_i32_0 = arith.constant 0 : i32
    %c0_i32_1 = arith.constant 0 : i32
    return %c0_i32, %c0_i32_0 : i32, i32
  }
  func.func @transform_3(%arg0: i32) -> (i32, i32) {
    %c0_i32 = arith.constant 0 : i32
    %c0_i32_0 = arith.constant 0 : i32
    return %arg0, %c0_i32 : i32, i32
  }
  func.func @transform_4(%arg0: i32) -> (i32, i32) {
    %c0_i32 = arith.constant 0 : i32
    %c0_i32_0 = arith.constant 0 : i32
    return %arg0, %c0_i32 : i32, i32
  }
}

module attributes {stable_mosaic.version = 11 : i64} {
  func.func @_aggr1_linear2_kernel(%arg0: i32, %arg1: memref<32x32xi8, #tpu.memory_space<vmem>>, %arg2: memref<32x16xbf16, #tpu.memory_space<vmem>>, %arg3: memref<32x1xf32, #tpu.memory_space<vmem>>, %arg4: memref<16x4xbf16, #tpu.memory_space<vmem>>, %arg5: memref<1x4xf32, #tpu.memory_space<vmem>>, %arg6: memref<32x4xbf16, #tpu.memory_space<vmem>>) attributes {dimension_semantics = [#tpu.dimension_semantics<parallel>], iteration_bounds = array<i64: 1>, scalar_prefetch = 0 : i64, scratch_operands = 0 : i64, tpu.core_type = #tpu.core_type<tc>, window_params = [{transform_indices = @transform_0, window_bounds = array<i64: 32, 32>}, {pipeline_mode = #tpu.pipeline_mode<synchronous>, transform_indices = @transform_1, window_bounds = array<i64: 32, 16>}, {transform_indices = @transform_2, window_bounds = array<i64: 32, 1>}, {pipeline_mode = #tpu.pipeline_mode<synchronous>, transform_indices = @transform_3, window_bounds = array<i64: 16, 4>}, {pipeline_mode = #tpu.pipeline_mode<synchronous>, transform_indices = @transform_4, window_bounds = array<i64: 1, 4>}, {transform_indices = @transform_5, window_bounds = array<i64: 32, 4>}]} {
    %c0 = arith.constant 0 : index
    %c0_0 = arith.constant 0 : index
    %0 = vector.load %arg1[%c0, %c0_0] : memref<32x32xi8, #tpu.memory_space<vmem>>, vector<32x32xi8>
    %1 = arith.sitofp %0 : vector<32x32xi8> to vector<32x32xf32>
    %2 = arith.truncf %1 : vector<32x32xf32> to vector<32x32xbf16>
    %c0_1 = arith.constant 0 : index
    %c0_2 = arith.constant 0 : index
    %3 = vector.load %arg2[%c0_1, %c0_2] : memref<32x16xbf16, #tpu.memory_space<vmem>>, vector<32x16xbf16>
    %cst = arith.constant dense<0.000000e+00> : vector<32x16xf32>
    %4 = tpu.matmul %2, %3, %cst {dimension_numbers = #tpu.dot_dimension_numbers<[1], [0], [0], [1], [0, 0, 1, 1], [], []>} : vector<32x32xbf16>, vector<32x16xbf16>, vector<32x16xf32> -> vector<32x16xf32>
    %c0_3 = arith.constant 0 : index
    %c0_4 = arith.constant 0 : index
    %5 = vector.load %arg3[%c0_3, %c0_4] : memref<32x1xf32, #tpu.memory_space<vmem>>, vector<32x1xf32>
    %6 = vector.broadcast %5 : vector<32x1xf32> to vector<32x16xf32>
    %7 = arith.mulf %4, %6 : vector<32x16xf32>
    %cst_5 = arith.constant 0.000000e+00 : f32
    %8 = vector.broadcast %cst_5 : f32 to vector<32x16xf32>
    %9 = arith.maximumf %7, %8 : vector<32x16xf32>
    %10 = arith.truncf %9 : vector<32x16xf32> to vector<32x16xbf16>
    %c0_6 = arith.constant 0 : index
    %c0_7 = arith.constant 0 : index
    %11 = vector.load %arg4[%c0_6, %c0_7] : memref<16x4xbf16, #tpu.memory_space<vmem>>, vector<16x4xbf16>
    %cst_8 = arith.constant dense<0.000000e+00> : vector<32x4xf32>
    %12 = tpu.matmul %10, %11, %cst_8 {dimension_numbers = #tpu.dot_dimension_numbers<[1], [0], [0], [1], [0, 0, 1, 1], [], []>} : vector<32x16xbf16>, vector<16x4xbf16>, vector<32x4xf32> -> vector<32x4xf32>
    %c0_9 = arith.constant 0 : index
    %c0_10 = arith.constant 0 : index
    %13 = vector.load %arg5[%c0_9, %c0_10] : memref<1x4xf32, #tpu.memory_space<vmem>>, vector<1x4xf32>
    %14 = vector.broadcast %13 : vector<1x4xf32> to vector<32x4xf32>
    %15 = arith.addf %12, %14 : vector<32x4xf32>
    %c0_11 = arith.constant 0 : index
    %c0_12 = arith.constant 0 : index
    %16 = vector.load %arg3[%c0_11, %c0_12] : memref<32x1xf32, #tpu.memory_space<vmem>>, vector<32x1xf32>
    %17 = vector.broadcast %16 : vector<32x1xf32> to vector<32x4xf32>
    %18 = arith.mulf %15, %17 : vector<32x4xf32>
    %19 = arith.truncf %18 : vector<32x4xf32> to vector<32x4xbf16>
    %c0_13 = arith.constant 0 : index
    %c0_14 = arith.constant 0 : index
    %20 = vector.load %arg6[%c0_13, %c0_14] : memref<32x4xbf16, #tpu.memory_space<vmem>>, vector<32x4xbf16>
    tpu.vector_store %arg6[%c0_13, %c0_14], %19 {strides = array<i32>} : memref<32x4xbf16, #tpu.memory_space<vmem>>, vector<32x4xbf16>,
    return
  }
  func.func @transform_0(%arg0: i32) -> (i32, i32) {
    %c0_i32 = arith.constant 0 : i32
    %c0_i32_0 = arith.constant 0 : i32
    return %arg0, %c0_i32 : i32, i32
  }
  func.func @transform_1(%arg0: i32) -> (i32, i32) {
    %c0_i32 = arith.constant 0 : i32
    %c0_i32_0 = arith.constant 0 : i32
    %c0_i32_1 = arith.constant 0 : i32
    return %c0_i32, %c0_i32_0 : i32, i32
  }
  func.func @transform_2(%arg0: i32) -> (i32, i32) {
    %c0_i32 = arith.constant 0 : i32
    %c0_i32_0 = arith.constant 0 : i32
    return %arg0, %c0_i32 : i32, i32
  }
  func.func @transform_3(%arg0: i32) -> (i32, i32) {
    %c0_i32 = arith.constant 0 : i32
    %c0_i32_0 = arith.constant 0 : i32
    %c0_i32_1 = arith.constant 0 : i32
    return %c0_i32, %c0_i32_0 : i32, i32
  }
  func.func @transform_4(%arg0: i32) -> (i32, i32) {
    %c0_i32 = arith.constant 0 : i32
    %c0_i32_0 = arith.constant 0 : i32
    %c0_i32_1 = arith.constant 0 : i32
    return %c0_i32, %c0_i32_0 : i32, i32
  }
  func.func @transform_5(%arg0: i32) -> (i32, i32) {
    %c0_i32 = arith.constant 0 : i32
    %c0_i32_0 = arith.constant 0 : i32
    return %arg0, %c0_i32 : i32, i32
  }
}

module attributes {stable_mosaic.version = 11 : i64} {
  func.func @_aggr2_logsoftmax_kernel(%arg0: i32, %arg1: memref<32x32xi8, #tpu.memory_space<vmem>>, %arg2: memref<32x4xbf16, #tpu.memory_space<vmem>>, %arg3: memref<32x1xf32, #tpu.memory_space<vmem>>, %arg4: memref<32x4xf32, #tpu.memory_space<vmem>>) attributes {dimension_semantics = [#tpu.dimension_semantics<parallel>], iteration_bounds = array<i64: 1>, scalar_prefetch = 0 : i64, scratch_operands = 0 : i64, tpu.core_type = #tpu.core_type<tc>, window_params = [{transform_indices = @transform_0, window_bounds = array<i64: 32, 32>}, {pipeline_mode = #tpu.pipeline_mode<synchronous>, transform_indices = @transform_1, window_bounds = array<i64: 32, 4>}, {transform_indices = @transform_2, window_bounds = array<i64: 32, 1>}, {transform_indices = @transform_3, window_bounds = array<i64: 32, 4>}]} {
    %c0 = arith.constant 0 : index
    %c0_0 = arith.constant 0 : index
    %0 = vector.load %arg1[%c0, %c0_0] : memref<32x32xi8, #tpu.memory_space<vmem>>, vector<32x32xi8>
    %1 = arith.sitofp %0 : vector<32x32xi8> to vector<32x32xf32>
    %2 = arith.truncf %1 : vector<32x32xf32> to vector<32x32xbf16>
    %c0_1 = arith.constant 0 : index
    %c0_2 = arith.constant 0 : index
    %3 = vector.load %arg2[%c0_1, %c0_2] : memref<32x4xbf16, #tpu.memory_space<vmem>>, vector<32x4xbf16>
    %cst = arith.constant dense<0.000000e+00> : vector<32x4xf32>
    %4 = tpu.matmul %2, %3, %cst {dimension_numbers = #tpu.dot_dimension_numbers<[1], [0], [0], [1], [0, 0, 1, 1], [], []>} : vector<32x32xbf16>, vector<32x4xbf16>, vector<32x4xf32> -> vector<32x4xf32>
    %c0_3 = arith.constant 0 : index
    %c0_4 = arith.constant 0 : index
    %5 = vector.load %arg3[%c0_3, %c0_4] : memref<32x1xf32, #tpu.memory_space<vmem>>, vector<32x1xf32>
    %6 = vector.broadcast %5 : vector<32x1xf32> to vector<32x4xf32>
    %7 = arith.mulf %4, %6 : vector<32x4xf32>
    %cst_5 = arith.constant dense<0xFF800000> : vector<32xf32>
    %8 = vector.multi_reduction <maximumf>, %7, %cst_5 [1] : vector<32x4xf32> to vector<32xf32>
    %9 = vector.shape_cast %8 : vector<32xf32> to vector<32x1xf32>
    %10 = vector.broadcast %9 : vector<32x1xf32> to vector<32x4xf32>
    %11 = arith.subf %7, %10 : vector<32x4xf32>
    %12 = math.exp %11 : vector<32x4xf32>
    %cst_6 = arith.constant dense<0.000000e+00> : vector<32xf32>
    %13 = vector.multi_reduction <add>, %12, %cst_6 [1] : vector<32x4xf32> to vector<32xf32>
    %14 = vector.shape_cast %13 : vector<32xf32> to vector<32x1xf32>
    %15 = math.log %14 : vector<32x1xf32>
    %16 = vector.broadcast %15 : vector<32x1xf32> to vector<32x4xf32>
    %17 = arith.subf %11, %16 : vector<32x4xf32>
    %c0_7 = arith.constant 0 : index
    %c0_8 = arith.constant 0 : index
    %18 = vector.load %arg4[%c0_7, %c0_8] : memref<32x4xf32, #tpu.memory_space<vmem>>, vector<32x4xf32>
    tpu.vector_store %arg4[%c0_7, %c0_8], %17 {strides = array<i32>} : memref<32x4xf32, #tpu.memory_space<vmem>>, vector<32x4xf32>,
    return
  }
  func.func @transform_0(%arg0: i32) -> (i32, i32) {
    %c0_i32 = arith.constant 0 : i32
    %c0_i32_0 = arith.constant 0 : i32
    return %arg0, %c0_i32 : i32, i32
  }
  func.func @transform_1(%arg0: i32) -> (i32, i32) {
    %c0_i32 = arith.constant 0 : i32
    %c0_i32_0 = arith.constant 0 : i32
    %c0_i32_1 = arith.constant 0 : i32
    return %c0_i32, %c0_i32_0 : i32, i32
  }
  func.func @transform_2(%arg0: i32) -> (i32, i32) {
    %c0_i32 = arith.constant 0 : i32
    %c0_i32_0 = arith.constant 0 : i32
    return %arg0, %c0_i32 : i32, i32
  }
  func.func @transform_3(%arg0: i32) -> (i32, i32) {
    %c0_i32 = arith.constant 0 : i32
    %c0_i32_0 = arith.constant 0 : i32
    return %arg0, %c0_i32 : i32, i32
  }
}

</mosaic_0001>

<llo_original>
// kernel: net_forward.3
$region0: #{net_forward.3}
  #allocation0 [shape = 'u32[]', space=smem, size = 0x4, offset = 0x4, fixed_abs, tag = 'smem constant byte address 0x4 - core index']
  #allocation1 [shape = 'u32[72,128]{1,0:T(1,128)}', space=vmem, size = 0x9000, scoped, tag = 'internal scratch']
  %s0 = inlined_call_operand.vmem [shape: f32[32,8], index: 0, kind: input, shape index: {}]
  %s1 = inlined_call_operand.vmem [shape: bf16[8,16], index: 1, kind: input, shape index: {}]
  %s2 = inlined_call_operand.vmem [shape: f32[1,16], index: 2, kind: input, shape index: {}]
  %s3 = inlined_call_operand.vmem [shape: f32[32,1], index: 3, kind: input, shape index: {}]
  %s4 = inlined_call_operand.vmem [shape: bf16[32,16], index: 4, kind: output, shape index: {}]
  %s5 = sld [smem:[#allocation0]]
  $region26: #{net_forward.3} parent=0
    _
  %s7 = ssub.s32 1, %s5
  %s8 = scalar_select 0, %s7, %s5
  // Predicated region
  $region2: #{net_forward.3} parent=0 // pred_check
    _
  $region3: #{net_forward.3} parent=0 // pred_check_branch
    %10 = sbr.rel (0) target = $region5
  $region4: #{net_forward.3} parent=0 // pred_region
    _
  $region5: #{net_forward.3} parent=0 // pred_fallthru
    _
  // Predicated region
  $region6: #{net_forward.3} parent=0 // pred_check
    _
  $region7: #{net_forward.3} parent=0 // pred_check_branch
    %12 = sbr.rel (0) target = $region9
  $region8: #{net_forward.3} parent=0 // pred_region
    _
  $region9: #{net_forward.3} parent=0 // pred_fallthru
    _
  // Predicated region
  $region10: #{net_forward.3} parent=0 // pred_check
    _
  $region11: #{net_forward.3} parent=0 // pred_check_branch
    %14 = sbr.rel (0) target = $region13
  $region12: #{net_forward.3} parent=0 // pred_region
    _
  $region13: #{net_forward.3} parent=0 // pred_fallthru
    _
  // Predicated region
  $region14: #{net_forward.3} parent=0 // pred_check
    _
  $region15: #{net_forward.3} parent=0 // pred_check_branch
    %16 = sbr.rel (0) target = $region17
  $region16: #{net_forward.3} parent=0 // pred_region
    _
  $region17: #{net_forward.3} parent=0 // pred_fallthru
    _
  %v18 = vld [vmem:[%s0] sm:$0xff]
  %v19 = vld [vmem:[%s0 + $0x8] sm:$0xff]
  %v20 = vld [vmem:[%s0 + $0x10] sm:$0xff]
  %v21 = vld [vmem:[%s0 + $0x18] sm:$0xff]
  %v22 = vpack.c.bf16 %v19, %v18
  %v23 = vpack.c.bf16 %v21, %v20
  %v24 = vld [vmem:[%s1] sm:$0xf]
  %v25 = vld [vmem:[%s2] sm:$0x1]
  %v27 = vperm.slane %v25, 0
  %vm29 = vcmask 64512
  %v31 = vsel %vm29, %v22, 0
  %v34 = vsel %vm29, %v23, 0
  %vm36 = vcmask 1043456
  %v38 = vsel %vm36, %v24, 0
  %40 = vmatpush.bf16.msra.mxu0 0
  %41 = vmatpush.bf16.msra.mxu0 0
  %42 = vmatpush.bf16.msra.mxu0 0
  %43 = vmatpush.bf16.msra.mxu0 0
  %44 = vmatpush.bf16.msra.mxu0 0
  %45 = vmatpush.bf16.msra.mxu0 0
  %46 = vmatpush.bf16.msra.mxu0 0
  %47 = vmatpush.bf16.msra.mxu0 %v38
  %48 = vmatmul.bf16.gmra.mxu0 %v31
  %v49 = vpop.f32.mrf.mxu0
  %v50 = vadd.f32 %v27, %v49
  %v51 = vpop.f32.mrf.mxu0
  %v52 = vadd.f32 %v27, %v51
  %53 = vmatmul.bf16.gmra.mxu0 %v34
  %v54 = vpop.f32.mrf.mxu0
  %v55 = vadd.f32 %v27, %v54
  %v56 = vpop.f32.mrf.mxu0
  %v57 = vadd.f32 %v27, %v56
  %58 = vdwg.mxu0
  %v59 = vld [vmem:[%s3] sm:$0xff]
  %v60 = vld [vmem:[%s3 + $0x8] sm:$0xff]
  %v61 = vld [vmem:[%s3 + $0x10] sm:$0xff]
  %v62 = vld [vmem:[%s3 + $0x18] sm:$0xff]
  %64 = vset.pattern.permute.xlu0 0
  %65 = vperm.xlu0 %64, %v59
  %v66 = vpop.permute.xlu0 %65
  %69 = vset.pattern.permute.xlu0 0
  %70 = vperm.xlu0 %69, %v60
  %v71 = vpop.permute.xlu0 %70
  %74 = vset.pattern.permute.xlu0 0
  %75 = vperm.xlu0 %74, %v61
  %v76 = vpop.permute.xlu0 %75
  %79 = vset.pattern.permute.xlu0 0
  %80 = vperm.xlu0 %79, %v62
  %v81 = vpop.permute.xlu0 %80
  %v83 = vmul.f32 %v50, %v66
  %v84 = vmul.f32 %v52, %v71
  %v85 = vmul.f32 %v55, %v76
  %v86 = vmul.f32 %v57, %v81
  %v87 = vpack.c.bf16 %v83, %v83
  %v88 = vpack.c.bf16 %v84, %v84
  %v89 = vpack.c.bf16 %v85, %v85
  %v90 = vpack.c.bf16 %v86, %v86
  %vm91 = vcmask 125952
  %92 = vst.msk [vmem:[%s4] sm:$0xf] %vm91, %v87
  %93 = vst.msk [vmem:[%s4 + $0x4] sm:$0xf] %vm91, %v88
  %94 = vst.msk [vmem:[%s4 + $0x8] sm:$0xf] %vm91, %v89
  %95 = vst.msk [vmem:[%s4 + $0xc] sm:$0xf] %vm91, %v90
  // Predicated region
  $region18: #{net_forward.3} parent=0 // pred_check
    _
  $region19: #{net_forward.3} parent=0 // pred_check_branch
    %97 = sbr.rel (0) target = $region21
  $region20: #{net_forward.3} parent=0 // pred_region
    _
  $region21: #{net_forward.3} parent=0 // pred_fallthru
    _
  // Predicated region
  $region22: #{net_forward.3} parent=0 // pred_check
    _
  $region23: #{net_forward.3} parent=0 // pred_check_branch
    %99 = sbr.rel (0) target = $region25
  $region24: #{net_forward.3} parent=0 // pred_region
    _
  $region25: #{net_forward.3} parent=0 // pred_fallthru
    _

// kernel: net_forward.4
$region0: #{net_forward.4}
  #allocation0 [shape = 'u32[]', space=smem, size = 0x4, offset = 0x4, fixed_abs, tag = 'smem constant byte address 0x4 - core index']
  #allocation1 [shape = 'u32[72,128]{1,0:T(1,128)}', space=vmem, size = 0x9000, scoped, tag = 'internal scratch']
  %s0 = inlined_call_operand.vmem [shape: s8[32,32], index: 0, kind: input, shape index: {}]
  %s1 = inlined_call_operand.vmem [shape: bf16[32,16], index: 1, kind: input, shape index: {}]
  %s2 = inlined_call_operand.vmem [shape: f32[32,1], index: 2, kind: input, shape index: {}]
  %s3 = inlined_call_operand.vmem [shape: bf16[16,4], index: 3, kind: input, shape index: {}]
  %s4 = inlined_call_operand.vmem [shape: f32[1,4], index: 4, kind: input, shape index: {}]
  %s5 = inlined_call_operand.vmem [shape: bf16[32,4], index: 5, kind: output, shape index: {}]
  %s6 = sld [smem:[#allocation0]]
  $region30: #{net_forward.4} parent=0
    _
  %s8 = ssub.s32 1, %s6
  %s9 = scalar_select 0, %s8, %s6
  // Predicated region
  $region2: #{net_forward.4} parent=0 // pred_check
    _
  $region3: #{net_forward.4} parent=0 // pred_check_branch
    %11 = sbr.rel (0) target = $region5
  $region4: #{net_forward.4} parent=0 // pred_region
    _
  $region5: #{net_forward.4} parent=0 // pred_fallthru
    _
  // Predicated region
  $region6: #{net_forward.4} parent=0 // pred_check
    _
  $region7: #{net_forward.4} parent=0 // pred_check_branch
    %13 = sbr.rel (0) target = $region9
  $region8: #{net_forward.4} parent=0 // pred_region
    _
  $region9: #{net_forward.4} parent=0 // pred_fallthru
    _
  // Predicated region
  $region10: #{net_forward.4} parent=0 // pred_check
    _
  $region11: #{net_forward.4} parent=0 // pred_check_branch
    %15 = sbr.rel (0) target = $region13
  $region12: #{net_forward.4} parent=0 // pred_region
    _
  $region13: #{net_forward.4} parent=0 // pred_fallthru
    _
  // Predicated region
  $region14: #{net_forward.4} parent=0 // pred_check
    _
  $region15: #{net_forward.4} parent=0 // pred_check_branch
    %17 = sbr.rel (0) target = $region17
  $region16: #{net_forward.4} parent=0 // pred_region
    _
  $region17: #{net_forward.4} parent=0 // pred_fallthru
    _
  // Predicated region
  $region18: #{net_forward.4} parent=0 // pred_check
    _
  $region19: #{net_forward.4} parent=0 // pred_check_branch
    %19 = sbr.rel (0) target = $region21
  $region20: #{net_forward.4} parent=0 // pred_region
    _
  $region21: #{net_forward.4} parent=0 // pred_fallthru
    _
  %v21 = vld [vmem:[%s0] sm:$0xff]
  %v22 = vunpack.c.0.s8 %v21
  %v23 = vunpack.c.1.s8 %v21
  %v24 = vunpack.c.2.s8 %v21
  %v25 = vunpack.c.3.s8 %v21
  %v26 = vcvt.s32.f32 %v22
  %v27 = vcvt.s32.f32 %v23
  %v28 = vcvt.s32.f32 %v24
  %v29 = vcvt.s32.f32 %v25
  %v30 = vpack.c.bf16 %v27, %v26
  %v31 = vpack.c.bf16 %v29, %v28
  %v32 = vld [vmem:[%s1] sm:$0xf]
  %v33 = vld [vmem:[%s1 + $0x4] sm:$0xf]
  %v34 = vld [vmem:[%s1 + $0x8] sm:$0xf]
  %v35 = vld [vmem:[%s1 + $0xc] sm:$0xf]
  %v40 = vunpack.c.l.b16 %v32
  %v41 = vunpack.c.l.b16 %v33
  %v42 = vunpack.c.l.b16 %v34
  %v43 = vunpack.c.l.b16 %v35
  %v44 = vpack.c.b16 %v41, %v40
  %v45 = vpack.c.b16 %v43, %v42
  %vm48 = vcmask 261120
  %v50 = vsel %vm48, %v30, 0
  %v53 = vsel %vm48, %v31, 0
  %55 = vmatpush.bf16.msra.mxu0 0
  %56 = vmatpush.bf16.msra.mxu0 0
  %57 = vmatpush.bf16.msra.mxu0 0
  %58 = vmatpush.bf16.msra.mxu0 0
  %59 = vmatpush.bf16.msra.mxu0 0
  %60 = vmatpush.bf16.msra.mxu0 0
  %61 = vmatpush.bf16.msra.mxu0 %v45
  %62 = vmatpush.bf16.msra.mxu0 %v44
  %63 = vmatmul.bf16.gmra.mxu0 %v50
  %v64 = vpop.f32.mrf.mxu0
  %v65 = vadd.f32 0.0, %v64
  %v66 = vpop.f32.mrf.mxu0
  %v67 = vadd.f32 0.0, %v66
  %68 = vmatmul.bf16.gmra.mxu0 %v53
  %v69 = vpop.f32.mrf.mxu0
  %v70 = vadd.f32 0.0, %v69
  %v71 = vpop.f32.mrf.mxu0
  %v72 = vadd.f32 0.0, %v71
  %73 = vdwg.mxu0
  %v74 = vld [vmem:[%s2] sm:$0xff]
  %v75 = vld [vmem:[%s2 + $0x8] sm:$0xff]
  %v76 = vld [vmem:[%s2 + $0x10] sm:$0xff]
  %v77 = vld [vmem:[%s2 + $0x18] sm:$0xff]
  %79 = vset.pattern.permute.xlu0 0
  %80 = vperm.xlu0 %79, %v74
  %v81 = vpop.permute.xlu0 %80
  %84 = vset.pattern.permute.xlu0 0
  %85 = vperm.xlu0 %84, %v75
  %v86 = vpop.permute.xlu0 %85
  %89 = vset.pattern.permute.xlu0 0
  %90 = vperm.xlu0 %89, %v76
  %v91 = vpop.permute.xlu0 %90
  %94 = vset.pattern.permute.xlu0 0
  %95 = vperm.xlu0 %94, %v77
  %v96 = vpop.permute.xlu0 %95
  %v98 = vmul.f32 %v65, %v81
  %v99 = vmul.f32 %v67, %v86
  %v100 = vmul.f32 %v70, %v91
  %v101 = vmul.f32 %v72, %v96
  %v102 = vmax.f32 %v98, 0.0
  %v103 = vmax.f32 %v99, 0.0
  %v104 = vmax.f32 %v100, 0.0
  %v105 = vmax.f32 %v101, 0.0
  %v106 = vpack.c.bf16 %v103, %v102
  %v107 = vpack.c.bf16 %v105, %v104
  %v108 = vld [vmem:[%s3] sm:$0xf]
  %v109 = vld [vmem:[%s3 + $0x4] sm:$0xf]
  %v110 = vld [vmem:[%s4] sm:$0x1]
  %v112 = vperm.slane %v110, 0
  %v116 = vunpack.c.l.b16 %v108
  %v117 = vunpack.c.l.b16 %v109
  %v118 = vpack.c.b16 %v117, %v116
  %vm120 = vcmask 130048
  %v122 = vsel %vm120, %v106, 0
  %v125 = vsel %vm120, %v107, 0
  %127 = vmatpush.bf16.msra.mxu0 0
  %128 = vmatpush.bf16.msra.mxu0 0
  %129 = vmatpush.bf16.msra.mxu0 0
  %130 = vmatpush.bf16.msra.mxu0 0
  %131 = vmatpush.bf16.msra.mxu0 0
  %132 = vmatpush.bf16.msra.mxu0 0
  %133 = vmatpush.bf16.msra.mxu0 0
  %134 = vmatpush.bf16.msra.mxu0 %v118
  %135 = vmatmul.bf16.gmra.mxu0 %v122
  %v136 = vpop.f32.mrf.mxu0
  %v137 = vadd.f32 %v112, %v136
  %v138 = vpop.f32.mrf.mxu0
  %v139 = vadd.f32 %v112, %v138
  %140 = vmatmul.bf16.gmra.mxu0 %v125
  %v141 = vpop.f32.mrf.mxu0
  %v142 = vadd.f32 %v112, %v141
  %v143 = vpop.f32.mrf.mxu0
  %v144 = vadd.f32 %v112, %v143
  %145 = vdwg.mxu0
  %v146 = vmul.f32 %v137, %v81
  %v147 = vmul.f32 %v139, %v86
  %v148 = vmul.f32 %v142, %v91
  %v149 = vmul.f32 %v144, %v96
  %v150 = vpack.c.bf16 %v146, %v146
  %v151 = vpack.c.bf16 %v147, %v147
  %v152 = vpack.c.bf16 %v148, %v148
  %v153 = vpack.c.bf16 %v149, %v149
  %vm154 = vcmask 27648
  %155 = vst.msk [vmem:[%s5] sm:$0xf] %vm154, %v150
  %156 = vst.msk [vmem:[%s5 + $0x4] sm:$0xf] %vm154, %v151
  %157 = vst.msk [vmem:[%s5 + $0x8] sm:$0xf] %vm154, %v152
  %158 = vst.msk [vmem:[%s5 + $0xc] sm:$0xf] %vm154, %v153
  // Predicated region
  $region22: #{net_forward.4} parent=0 // pred_check
    _
  $region23: #{net_forward.4} parent=0 // pred_check_branch
    %160 = sbr.rel (0) target = $region25
  $region24: #{net_forward.4} parent=0 // pred_region
    _
  $region25: #{net_forward.4} parent=0 // pred_fallthru
    _
  // Predicated region
  $region26: #{net_forward.4} parent=0 // pred_check
    _
  $region27: #{net_forward.4} parent=0 // pred_check_branch
    %162 = sbr.rel (0) target = $region29
  $region28: #{net_forward.4} parent=0 // pred_region
    _
  $region29: #{net_forward.4} parent=0 // pred_fallthru
    _

// kernel: net_forward.5
$region0: #{net_forward.5}
  #allocation0 [shape = 'u32[]', space=smem, size = 0x4, offset = 0x4, fixed_abs, tag = 'smem constant byte address 0x4 - core index']
  #allocation1 [shape = 'u32[72,128]{1,0:T(1,128)}', space=vmem, size = 0x9000, scoped, tag = 'internal scratch']
  %s0 = inlined_call_operand.vmem [shape: s8[32,32], index: 0, kind: input, shape index: {}]
  %s1 = inlined_call_operand.vmem [shape: bf16[32,4], index: 1, kind: input, shape index: {}]
  %s2 = inlined_call_operand.vmem [shape: f32[32,1], index: 2, kind: input, shape index: {}]
  %s3 = inlined_call_operand.vmem [shape: f32[32,4], index: 3, kind: output, shape index: {}]
  %s4 = sld [smem:[#allocation0]]
  $region22: #{net_forward.5} parent=0
    _
  %s6 = ssub.s32 1, %s4
  %s7 = scalar_select 0, %s6, %s4
  // Predicated region
  $region2: #{net_forward.5} parent=0 // pred_check
    _
  $region3: #{net_forward.5} parent=0 // pred_check_branch
    %9 = sbr.rel (0) target = $region5
  $region4: #{net_forward.5} parent=0 // pred_region
    _
  $region5: #{net_forward.5} parent=0 // pred_fallthru
    _
  // Predicated region
  $region6: #{net_forward.5} parent=0 // pred_check
    _
  $region7: #{net_forward.5} parent=0 // pred_check_branch
    %11 = sbr.rel (0) target = $region9
  $region8: #{net_forward.5} parent=0 // pred_region
    _
  $region9: #{net_forward.5} parent=0 // pred_fallthru
    _
  // Predicated region
  $region10: #{net_forward.5} parent=0 // pred_check
    _
  $region11: #{net_forward.5} parent=0 // pred_check_branch
    %13 = sbr.rel (0) target = $region13
  $region12: #{net_forward.5} parent=0 // pred_region
    _
  $region13: #{net_forward.5} parent=0 // pred_fallthru
    _
  %v15 = vld [vmem:[%s0] sm:$0xff]
  %v16 = vunpack.c.0.s8 %v15
  %v17 = vunpack.c.1.s8 %v15
  %v18 = vunpack.c.2.s8 %v15
  %v19 = vunpack.c.3.s8 %v15
  %v20 = vcvt.s32.f32 %v16
  %v21 = vcvt.s32.f32 %v17
  %v22 = vcvt.s32.f32 %v18
  %v23 = vcvt.s32.f32 %v19
  %v24 = vpack.c.bf16 %v21, %v20
  %v25 = vpack.c.bf16 %v23, %v22
  %v26 = vld [vmem:[%s1] sm:$0xf]
  %v27 = vld [vmem:[%s1 + $0x4] sm:$0xf]
  %v28 = vld [vmem:[%s1 + $0x8] sm:$0xf]
  %v29 = vld [vmem:[%s1 + $0xc] sm:$0xf]
  %v34 = vunpack.c.l.b16 %v26
  %v35 = vunpack.c.l.b16 %v27
  %v36 = vunpack.c.l.b16 %v28
  %v37 = vunpack.c.l.b16 %v29
  %v38 = vpack.c.b16 %v35, %v34
  %v39 = vpack.c.b16 %v37, %v36
  %vm42 = vcmask 261120
  %v44 = vsel %vm42, %v24, 0
  %v47 = vsel %vm42, %v25, 0
  %49 = vmatpush.bf16.msra.mxu0 0
  %50 = vmatpush.bf16.msra.mxu0 0
  %51 = vmatpush.bf16.msra.mxu0 0
  %52 = vmatpush.bf16.msra.mxu0 0
  %53 = vmatpush.bf16.msra.mxu0 0
  %54 = vmatpush.bf16.msra.mxu0 0
  %55 = vmatpush.bf16.msra.mxu0 %v39
  %56 = vmatpush.bf16.msra.mxu0 %v38
  %57 = vmatmul.bf16.gmra.mxu0 %v44
  %v58 = vpop.f32.mrf.mxu0
  %v59 = vadd.f32 0.0, %v58
  %v60 = vpop.f32.mrf.mxu0
  %v61 = vadd.f32 0.0, %v60
  %62 = vmatmul.bf16.gmra.mxu0 %v47
  %v63 = vpop.f32.mrf.mxu0
  %v64 = vadd.f32 0.0, %v63
  %v65 = vpop.f32.mrf.mxu0
  %v66 = vadd.f32 0.0, %v65
  %67 = vdwg.mxu0
  %v68 = vld [vmem:[%s2] sm:$0xff]
  %v69 = vld [vmem:[%s2 + $0x8] sm:$0xff]
  %v70 = vld [vmem:[%s2 + $0x10] sm:$0xff]
  %v71 = vld [vmem:[%s2 + $0x18] sm:$0xff]
  %73 = vset.pattern.permute.xlu0 0
  %74 = vperm.xlu0 %73, %v68
  %v75 = vpop.permute.xlu0 %74
  %78 = vset.pattern.permute.xlu0 0
  %79 = vperm.xlu0 %78, %v69
  %v80 = vpop.permute.xlu0 %79
  %83 = vset.pattern.permute.xlu0 0
  %84 = vperm.xlu0 %83, %v70
  %v85 = vpop.permute.xlu0 %84
  %88 = vset.pattern.permute.xlu0 0
  %89 = vperm.xlu0 %88, %v71
  %v90 = vpop.permute.xlu0 %89
  %v92 = vmul.f32 %v59, %v75
  %v93 = vmul.f32 %v61, %v80
  %v94 = vmul.f32 %v64, %v85
  %v95 = vmul.f32 %v66, %v90
  %vm96 = vcmask 31744
  %v97 = vsel %vm96, %v92, -inf
  %98 = vmax.xlane.f32.xlu0 %v97
  %v99 = vpop.xlane.xlu0 %98
  %v100 = vsel %vm96, %v93, -inf
  %101 = vmax.xlane.f32.xlu0 %v100
  %v102 = vpop.xlane.xlu0 %101
  %v103 = vsel %vm96, %v94, -inf
  %104 = vmax.xlane.f32.xlu0 %v103
  %v105 = vpop.xlane.xlu0 %104
  %v106 = vsel %vm96, %v95, -inf
  %107 = vmax.xlane.f32.xlu0 %v106
  %v108 = vpop.xlane.xlu0 %107
  %v109 = vsub.f32 %v92, %v99
  %v110 = vsub.f32 %v93, %v102
  %v111 = vsub.f32 %v94, %v105
  %v112 = vsub.f32 %v95, %v108
  %v113 = vmul.f32 %v109, 1.442695
  %v114 = vpow.pop %v113
  %v115 = vmul.f32 %v110, 1.442695
  %v116 = vpow.pop %v115
  %v117 = vmul.f32 %v111, 1.442695
  %v118 = vpow.pop %v117
  %v119 = vmul.f32 %v112, 1.442695
  %v120 = vpow.pop %v119
  %v121 = vsel %vm96, %v114, 0.0
  %122 = vadd.xlane.f32.xlu0 %v121
  %v123 = vpop.xlane.xlu0 %122
  %v124 = vsel %vm96, %v116, 0.0
  %125 = vadd.xlane.f32.xlu0 %v124
  %v126 = vpop.xlane.xlu0 %125
  %v127 = vsel %vm96, %v118, 0.0
  %128 = vadd.xlane.f32.xlu0 %v127
  %v129 = vpop.xlane.xlu0 %128
  %v130 = vsel %vm96, %v120, 0.0
  %131 = vadd.xlane.f32.xlu0 %v130
  %v132 = vpop.xlane.xlu0 %131
  %v133 = vlog2.pop %v123
  %v134 = vmul.f32 %v133, 0.6931472
  %v135 = vlog2.pop %v126
  %v136 = vmul.f32 %v135, 0.6931472
  %v137 = vlog2.pop %v129
  %v138 = vmul.f32 %v137, 0.6931472
  %v139 = vlog2.pop %v132
  %v140 = vmul.f32 %v139, 0.6931472
  %v141 = vsub.f32 %v109, %v134
  %v142 = vsub.f32 %v110, %v136
  %v143 = vsub.f32 %v111, %v138
  %v144 = vsub.f32 %v112, %v140
  %145 = vst.msk [vmem:[%s3] sm:$0xff] %vm96, %v141
  %146 = vst.msk [vmem:[%s3 + $0x8] sm:$0xff] %vm96, %v142
  %147 = vst.msk [vmem:[%s3 + $0x10] sm:$0xff] %vm96, %v143
  %148 = vst.msk [vmem:[%s3 + $0x18] sm:$0xff] %vm96, %v144
  // Predicated region
  $region14: #{net_forward.5} parent=0 // pred_check
    _
  $region15: #{net_forward.5} parent=0 // pred_check_branch
    %150 = sbr.rel (0) target = $region17
  $region16: #{net_forward.5} parent=0 // pred_region
    _
  $region17: #{net_forward.5} parent=0 // pred_fallthru
    _
  // Predicated region
  $region18: #{net_forward.5} parent=0 // pred_check
    _
  $region19: #{net_forward.5} parent=0 // pred_check_branch
    %152 = sbr.rel (0) target = $region21
  $region20: #{net_forward.5} parent=0 // pred_region
    _
  $region21: #{net_forward.5} parent=0 // pred_fallthru
    _

</llo_original>
